<compile_context>
chip_gen: v5e
topology: v5e:2x2
jax: 0.10.0
libtpu: 0.0.40
codegen_flags: <defaults>
</compile_context>

<pallas_src>
import functools
import math

import jax
import jax.numpy as jnp
from jax.experimental import pallas as pl
from jax.experimental.pallas import tpu as pltpu


def _round_up(x, m):
    return ((x + m - 1) // m) * m


def _cdiv(a, b):
    return -(-a // b)


def _pick_tile(dim, pref, align):
    """Aligned tile <= ~pref chosen so the padded axis has minimal waste.

    Small axes get a single exact (aligned) block; large axes get the block
    count implied by `pref` and the smallest aligned tile covering the axis
    in that many blocks (keeps zero-padding to < one alignment unit in the
    common case)."""
    dim_r = _round_up(dim, align)
    if dim_r <= pref:
        return dim_r
    nblocks = _cdiv(dim_r, pref)
    return _round_up(_cdiv(dim_r, nblocks), align)


def _vmem_limit_bytes():
    """Generation-aware scoped-VMEM limit: ~3/4 of physical capacity
    (v5e/v6e: 96 MiB, v7x: 48 MiB); falls back to a v7x-safe value."""
    try:
        cap = int(getattr(pltpu.get_tpu_info(), "vmem_capacity_bytes", 64 << 20))
    except Exception:  # query unavailable (e.g. interpret mode)
        cap = 64 << 20
    return int(min(cap * 3 // 4, 100 << 20))


def _make_kernel(nk, direct_f32):
    """Build the matmul+bias kernel for a K-reduction of `nk` grid steps.

    Returns (kernel_fn, needs_f32_scratch).  `nk` is a static Python int, so
    the single-step case compiles to a single fused dot+bias store with no
    conditionals and no accumulator read-modify-write."""
    if direct_f32:

        def kernel(x_ref, w_ref, b_ref, o_ref):
            part = jnp.dot(
                x_ref[...], w_ref[...], preferred_element_type=jnp.float32
            )
            if nk == 1:
                o_ref[...] = part + b_ref[...]
            else:
                k = pl.program_id(2)

                @pl.when(k == 0)
                def _():
                    o_ref[...] = part  # no zero-init store

                @pl.when(jnp.logical_and(k > 0, k < nk - 1))
                def _():
                    o_ref[...] += part

                @pl.when(k == nk - 1)
                def _():
                    o_ref[...] += part + b_ref[...]  # bias fused, single RMW

        return kernel, False

    if nk == 1:

        def kernel(x_ref, w_ref, b_ref, o_ref):
            part = jnp.dot(
                x_ref[...], w_ref[...], preferred_element_type=jnp.float32
            )
            o_ref[...] = (part + b_ref[...]).astype(o_ref.dtype)

        return kernel, False

    def kernel(x_ref, w_ref, b_ref, o_ref, acc_ref):
        k = pl.program_id(2)
        part = jnp.dot(
            x_ref[...], w_ref[...], preferred_element_type=jnp.float32
        )

        @pl.when(k == 0)
        def _():
            acc_ref[...] = part  # no zero-init store

        @pl.when(k > 0)
        def _():
            acc_ref[...] += part

        @pl.when(k == nk - 1)
        def _():
            o_ref[...] = (acc_ref[...] + b_ref[...]).astype(o_ref.dtype)

    return kernel, True


@functools.partial(jax.jit, static_argnames=("chunks", "cast_to_bf16"))
def chunk_fan_in(x, w, b, *, chunks, cast_to_bf16=False):
    """ChunkFanIn forward.

    x: (..., in_dim)
    w: (chunks, chunk_dim, out_dim)   -- PyTorch's per-chunk W_i^T
    b: (chunks, out_dim)
    returns (..., out_dim)

    cast_to_bf16: optional (numerics-affecting) fast path that feeds the MXU
    bf16 inputs while keeping f32 accumulation.  Off by default.
    """
    *lead, in_dim = x.shape
    assert in_dim % chunks == 0, (in_dim, chunks)
    chunk_dim = in_dim // chunks
    assert w.shape[:2] == (chunks, chunk_dim), w.shape
    out_dim = w.shape[-1]
    assert b.shape == (chunks, out_dim), b.shape

    M = math.prod(lead) if lead else 1
    K, N = in_dim, out_dim
    out_dtype = x.dtype

    # Cheap glue (no full-tensor transpose): flatten leading dims, collapse
    # the chunk axis of the weights (contiguous reshape), pre-sum the biases
    # once in f32 so the hot loop is a pure MXU accumulate.
    x2 = x.reshape(M, K)
    w2 = w.reshape(K, N)
    if cast_to_bf16 and x2.dtype == jnp.float32:
        x2 = x2.astype(jnp.bfloat16)
        w2 = w2.astype(jnp.bfloat16)
    b2 = b.sum(axis=0, dtype=jnp.float32).reshape(1, N)

    in_itemsize = jnp.dtype(x2.dtype).itemsize
    out_itemsize = jnp.dtype(out_dtype).itemsize
    direct_f32 = out_dtype == jnp.float32

    # --- dtype-aware tile preferences (constant input-tile byte budget) ---
    if in_itemsize >= 4:
        sub_align, pref_m, pref_n, pref_k = 8, 1024, 1024, 1024
    elif in_itemsize == 2:
        sub_align, pref_m, pref_n, pref_k = 16, 1024, 1024, 2048
    else:
        sub_align, pref_m, pref_n, pref_k = 32, 1024, 1024, 4096

    tm = _pick_tile(M, pref_m, sub_align)
    tn = _pick_tile(N, pref_n, 128)
    tk = _pick_tile(K, pref_k, 128)

    # --- keep the double-buffered working set inside the scoped-VMEM budget ---
    vmem_limit = _vmem_limit_bytes()
    budget = (vmem_limit * 4) // 5  # headroom for compiler scratch

    def working_set(tm_, tn_, tk_):
        inp = 2 * (tm_ * tk_ + tk_ * tn_) * in_itemsize  # x, w double-buffered
        outp = 2 * tm_ * tn_ * out_itemsize               # output double-buffered
        acc = 0 if direct_f32 else tm_ * tn_ * 4          # f32 scratch accumulator
        return inp + outp + acc

    while working_set(tm, tn, tk) > budget:
        if tk >= max(tm, tn) and tk > 128:
            tk = max(128, _round_up(tk // 2, 128))
        elif tn >= tm and tn > 128:
            tn = max(128, _round_up(tn // 2, 128))
        elif tm > sub_align:
            tm = max(sub_align, _round_up(tm // 2, sub_align))
        else:
            break

    # --- v7x megacore: guarantee >= 2 blocks on the parallel axes ---
    if (_round_up(M, tm) // tm) * (_round_up(N, tn) // tn) == 1 and tm >= 2 * sub_align:
        tm = _round_up(_cdiv(tm, 2), sub_align)

    Mp, Np, Kp = _round_up(M, tm), _round_up(N, tn), _round_up(K, tk)
    grid = (Mp // tm, Np // tn, Kp // tk)
    nk = grid[2]

    # --- pad to tile multiples; zero pads are exact for the matmul and the
    #     padded rows/cols are sliced off below (lane-dense output stores) ---
    if (Mp, Kp) != (M, K):
        x2 = jnp.pad(x2, ((0, Mp - M), (0, Kp - K)))
    if (Kp, Np) != (K, N):
        w2 = jnp.pad(w2, ((0, Kp - K), (0, Np - N)))
    if Np != N:
        b2 = jnp.pad(b2, ((0, 0), (0, Np - N)))

    kernel, needs_acc = _make_kernel(nk, direct_f32)
    scratch = [pltpu.VMEM((tm, tn), jnp.float32)] if needs_acc else []

    cost = pl.CostEstimate(
        flops=2 * M * N * K,
        transcendentals=0,
        bytes_accessed=int(
            M * K * in_itemsize + K * N * in_itemsize + M * N * out_itemsize + N * 4
        ),
    )

    out = pl.pallas_call(
        kernel,
        out_shape=jax.ShapeDtypeStruct((Mp, Np), out_dtype),
        grid_spec=pltpu.PrefetchScalarGridSpec(
            num_scalar_prefetch=0,
            grid=grid,
            in_specs=[
                pl.BlockSpec((tm, tk), lambda i, j, k: (i, k)),
                pl.BlockSpec((tk, tn), lambda i, j, k: (k, j)),
                pl.BlockSpec((1, tn), lambda i, j, k: (0, j)),
            ],
            out_specs=pl.BlockSpec((tm, tn), lambda i, j, k: (i, j)),
            scratch_shapes=scratch,
        ),
        compiler_params=pltpu.CompilerParams(
            dimension_semantics=("parallel", "parallel", "arbitrary"),
            vmem_limit_bytes=vmem_limit,
        ),
        cost_estimate=cost,
    )(x2, w2, b2)

    if (Mp, Np) != (M, N):
        out = out[:M, :N]
    return out.reshape(*lead, out_dim)


def _reference(x, w, b):
    """Pure-JAX reference of the PyTorch forward (per-chunk Linear, then sum)."""
    chunks, chunk_dim, out_dim = w.shape
    *lead, in_dim = x.shape
    xf = x.astype(jnp.float32).reshape(*lead, chunks, chunk_dim)
    out = jnp.einsum("...cd,cdo->...o", xf, w.astype(jnp.float32))
    out = out + b.astype(jnp.float32).sum(axis=0)
    return out.astype(x.dtype)


def _rand_params(key, chunks, chunk_dim, out_dim, dtype):
    kw, kb = jax.random.split(key)
    bound = 1.0 / (chunk_dim ** 0.5)
    w = jax.random.uniform(kw, (chunks, chunk_dim, out_dim), jnp.float32, -bound, bound)
    b = jax.random.uniform(kb, (chunks, out_dim), jnp.float32, -bound, bound)
    return w.astype(dtype), b.astype(dtype)


if __name__ == "__main__":
    root = jax.random.PRNGKey(0)

    # --- 1) Small shapes consistent with the module (single K step) ---
    k1, k2, k3, k4 = jax.random.split(root, 4)
    batch, seq, in_dim, out_dim, chunks = 2, 8, 32, 16, 4
    x = jax.random.normal(k1, (batch, seq, in_dim), dtype=jnp.float32)
    w, b = _rand_params(k1, chunks, in_dim // chunks, out_dim, jnp.float32)
    out = jax.block_until_ready(chunk_fan_in(x, w, b, chunks=chunks))
    ref = _reference(x, w, b)
    assert out.shape == (batch, seq, out_dim), out.shape
    assert jnp.allclose(out, ref, atol=1e-5, rtol=1e-5), float(jnp.max(jnp.abs(out - ref)))

    # --- 2) Multi-step K reduction (nk > 1), f32 accumulate-in-output path ---
    batch2, seq2, in_dim2, out_dim2, chunks2 = 4, 32, 2048, 256, 8
    x2 = jax.random.normal(k2, (batch2, seq2, in_dim2), dtype=jnp.float32)
    w2 = jax.random.normal(k2, (chunks2, in_dim2 // chunks2, out_dim2), dtype=jnp.float32) * 0.02
    b2 = jax.random.normal(jax.random.fold_in(k2, 1), (chunks2, out_dim2), dtype=jnp.float32) * 0.02
    out2 = jax.block_until_ready(chunk_fan_in(x2, w2, b2, chunks=chunks2))
    ref2 = _reference(x2, w2, b2)
    assert out2.shape == (batch2, seq2, out_dim2), out2.shape
    assert jnp.allclose(out2, ref2, atol=1e-3, rtol=1e-4), float(jnp.max(jnp.abs(out2 - ref2)))

    # --- 3) Non-divisible M/N/K (exercises the wrapper-side padding) ---
    batch3, seq3, in_dim3, out_dim3, chunks3 = 2, 7, 48, 24, 3
    x3 = jax.random.normal(k3, (batch3, seq3, in_dim3), dtype=jnp.float32)
    w3, b3 = _rand_params(k3, chunks3, in_dim3 // chunks3, out_dim3, jnp.float32)
    out3 = jax.block_until_ready(chunk_fan_in(x3, w3, b3, chunks=chunks3))
    ref3 = _reference(x3, w3, b3)
    assert out3.shape == (batch3, seq3, out_dim3), out3.shape
    assert jnp.allclose(out3, ref3, atol=1e-5, rtol=1e-5), float(jnp.max(jnp.abs(out3 - ref3)))

    # --- 4) bf16 inputs, multi-step K (exercises the f32 VMEM accumulator path) ---
    batch4, seq4, in_dim4, out_dim4, chunks4 = 2, 32, 4096, 192, 8
    x4 = (jax.random.normal(k4, (batch4, seq4, in_dim4), dtype=jnp.float32)).astype(jnp.bfloat16)
    w4 = (jax.random.normal(k4, (chunks4, in_dim4 // chunks4, out_dim4), dtype=jnp.float32) * 0.02).astype(jnp.bfloat16)
    b4 = (jax.random.normal(jax.random.fold_in(k4, 1), (chunks4, out_dim4), dtype=jnp.float32) * 0.02).astype(jnp.bfloat16)
    out4 = jax.block_until_ready(chunk_fan_in(x4, w4, b4, chunks=chunks4))
    ref4 = _reference(x4, w4, b4)
    assert out4.shape == (batch4, seq4, out_dim4), out4.shape
    assert jnp.allclose(out4.astype(jnp.float32), ref4.astype(jnp.float32), atol=5e-2, rtol=5e-2), float(
        jnp.max(jnp.abs(out4.astype(jnp.float32) - ref4.astype(jnp.float32)))
    )

    print("KERNEL_OK")
</pallas_src>

<mosaic_0001>
module attributes {stable_mosaic.version = 11 : i64} {
  func.func @kernel(%arg0: i32, %arg1: i32, %arg2: i32, %arg3: memref<8x128xf32, #tpu.memory_space<vmem>>, %arg4: memref<128x128xf32, #tpu.memory_space<vmem>>, %arg5: memref<1x128xf32, #tpu.memory_space<vmem>>, %arg6: memref<8x128xf32, #tpu.memory_space<vmem>>) attributes {dimension_semantics = [#tpu.dimension_semantics<parallel>, #tpu.dimension_semantics<parallel>, #tpu.dimension_semantics<arbitrary>], iteration_bounds = array<i64: 2, 1, 1>, scalar_prefetch = 0 : i64, scratch_operands = 0 : i64, tpu.core_type = #tpu.core_type<tc>, window_params = [{transform_indices = @transform_0, window_bounds = array<i64: 8, 128>}, {transform_indices = @transform_1, window_bounds = array<i64: 128, 128>}, {transform_indices = @transform_2, window_bounds = array<i64: 1, 128>}, {transform_indices = @transform_3, window_bounds = array<i64: 8, 128>}]} {
    %c0 = arith.constant 0 : index
    %c0_0 = arith.constant 0 : index
    %0 = vector.load %arg3[%c0, %c0_0] : memref<8x128xf32, #tpu.memory_space<vmem>>, vector<8x128xf32>
    %c0_1 = arith.constant 0 : index
    %c0_2 = arith.constant 0 : index
    %1 = vector.load %arg4[%c0_1, %c0_2] : memref<128x128xf32, #tpu.memory_space<vmem>>, vector<128x128xf32>
    %cst = arith.constant dense<0.000000e+00> : vector<8x128xf32>
    %2 = tpu.matmul %0, %1, %cst {dimension_numbers = #tpu.dot_dimension_numbers<[1], [0], [0], [1], [0, 0, 1, 1], [], []>} : vector<8x128xf32>, vector<128x128xf32>, vector<8x128xf32> -> vector<8x128xf32>
    %c0_3 = arith.constant 0 : index
    %c0_4 = arith.constant 0 : index
    %3 = vector.load %arg5[%c0_3, %c0_4] : memref<1x128xf32, #tpu.memory_space<vmem>>, vector<1x128xf32>
    %4 = vector.broadcast %3 : vector<1x128xf32> to vector<8x128xf32>
    %5 = arith.addf %2, %4 : vector<8x128xf32>
    %c0_5 = arith.constant 0 : index
    %c0_6 = arith.constant 0 : index
    %6 = vector.load %arg6[%c0_5, %c0_6] : memref<8x128xf32, #tpu.memory_space<vmem>>, vector<8x128xf32>
    tpu.vector_store %arg6[%c0_5, %c0_6], %5 {strides = array<i32>} : memref<8x128xf32, #tpu.memory_space<vmem>>, vector<8x128xf32>,
    return
  }
  func.func @transform_0(%arg0: i32, %arg1: i32, %arg2: i32) -> (i32, i32) {
    %c0_i32 = arith.constant 0 : i32
    return %arg0, %arg2 : i32, i32
  }
  func.func @transform_1(%arg0: i32, %arg1: i32, %arg2: i32) -> (i32, i32) {
    %c0_i32 = arith.constant 0 : i32
    return %arg2, %arg1 : i32, i32
  }
  func.func @transform_2(%arg0: i32, %arg1: i32, %arg2: i32) -> (i32, i32) {
    %c0_i32 = arith.constant 0 : i32
    %c0_i32_0 = arith.constant 0 : i32
    return %c0_i32, %arg1 : i32, i32
  }
  func.func @transform_3(%arg0: i32, %arg1: i32, %arg2: i32) -> (i32, i32) {
    %c0_i32 = arith.constant 0 : i32
    return %arg0, %arg1 : i32, i32
  }
}

</mosaic_0001>

<llo_original>
// kernel: chunk_fan_in.1
$region0: #{chunk_fan_in.1}
  #allocation0 [shape = 'u32[]', space=smem, size = 0x4, offset = 0x4, fixed_abs, tag = 'smem constant byte address 0x4 - core index']
  #allocation1 [shape = 'u32[72,128]{1,0:T(1,128)}', space=vmem, size = 0x9000, scoped, tag = 'internal scratch']
  %s0 = inlined_call_operand.vmem [shape: f32[16,128], index: 0, kind: input, shape index: {}]
  %s1 = inlined_call_operand.vmem [shape: f32[128,128], index: 1, kind: input, shape index: {}]
  %s2 = inlined_call_operand.vmem [shape: f32[1,128], index: 2, kind: input, shape index: {}]
  %s3 = inlined_call_operand.vmem [shape: f32[16,128], index: 3, kind: output, shape index: {}]
  %s4 = sld [smem:[#allocation0]]
  $region45: #{chunk_fan_in.1} parent=0
    _
  %s6 = ssub.s32 1, %s4
  %s7 = scalar_select 0, %s6, %s4
  loop: start=0, step=1, limit=4
  $region2: #{chunk_fan_in.1} parent=0 // loop_pre_header
    _
  $region3: #{chunk_fan_in.1} parent=0 // loop_header
    %s9 = sphi 0, %s13
    %p10 = scmp.ge.s32.totalorder %s9, 4
    %s16 = sphi 0, %s35
    %s17 = sphi 0, %s31
    %s18 = sphi 0, %s27
    %s19 = sphi 0, %s16
    %s20 = sphi 0, %s17
    %s21 = sphi 0, %s18
    %s22 = sphi 0, %s19
    %s23 = sphi 0, %s20
    %s24 = sphi 0, %s21
    %s40 = sphi 0, %s42
    %s43 = sphi 0, %s40
    %s44 = sphi 0, %s43
    %s60 = sphi 0, %s44
    %s68 = sphi 0, %s70
    %s71 = sphi 0, %s68
    %s72 = sphi 0, %s71
    %s88 = sphi 0, %s72
    %s94 = sphi 0, %s96
    %s97 = sphi 0, %s94
    %s98 = sphi 0, %s97
    %s114 = sphi 0, %s98
    %s122 = sphi 0, %s124
    %s125 = sphi 0, %s122
    %s126 = sphi 0, %s125
    %s142 = sphi 0, %s126
  $region4: #{chunk_fan_in.1} parent=0 // loop_header_branch
    %12 = sbr.rel (%p10) target = $region8
  $region5: #{chunk_fan_in.1} parent=0 // loop_body
    %s14 = ssub.s32 %s9, 1
    %s15 = ssub.s32 %s9, 2
    %s25 = sadd.s32 1, %s18
    %p26 = scmp.ge.s32.totalorder %s25, 1
    %s27 = scalar_select %p26, 0, %s25
    %s28 = sadd.s32 1, %s17
    %s29 = scalar_select %p26, %s28, %s17
    %p30 = scmp.ge.s32.totalorder %s29, 1
    %s31 = scalar_select %p30, 0, %s29
    %s32 = sadd.s32 1, %s16
    %s33 = scalar_select %p30, %s32, %s16
    %p34 = scmp.ge.s32.totalorder %s33, 2
    %s35 = scalar_select %p34, 0, %s33
    %s36 = ssub.s32 %s16, %s35
    %s37 = ssub.s32 %s18, %s27
    %s38 = sor.u32 %s36, %s37
    %p39 = scmp.eq.s32.totalorder %s38, 0
    %s41 = sadd.s32 %s40, 1
    %s42 = scalar_select %p39, %s40, %s41
    %p45 = pneg %p39
    %p46 = scmp.eq.s32.totalorder %s9, 1
    %p47 = por %p45, %p46
    %p48 = scmp.ne.s32.totalorder %s40, %s43
    %p49 = scmp.eq.s32.totalorder %s9, 0
    %p50 = por %p48, %p49
    %p51 = scmp.ne.s32.totalorder %s40, %s43
    %p52 = scmp.eq.s32.totalorder %s14, 1
    %p53 = por %p51, %p52
    %p54 = scmp.ne.s32.totalorder %s43, %s44
    %p55 = scmp.eq.s32.totalorder %s14, 0
    %p56 = por %p54, %p55
    %p57 = scmp.ne.s32.totalorder %s43, %s44
    %p58 = scmp.eq.s32.totalorder %s15, 1
    %p59 = por %p57, %p58
    %p61 = scmp.ne.s32.totalorder %s44, %s60
    %p62 = scmp.eq.s32.totalorder %s15, 0
    %p63 = por %p61, %p62
    %s64 = ssub.s32 %s18, %s27
    %s65 = ssub.s32 %s17, %s31
    %s66 = sor.u32 %s64, %s65
    %p67 = scmp.eq.s32.totalorder %s66, 0
    %s69 = sadd.s32 %s68, 1
    %s70 = scalar_select %p67, %s68, %s69
    %p73 = pneg %p67
    %p74 = scmp.eq.s32.totalorder %s9, 1
    %p75 = por %p73, %p74
    %p76 = scmp.ne.s32.totalorder %s68, %s71
    %p77 = scmp.eq.s32.totalorder %s9, 0
    %p78 = por %p76, %p77
    %p79 = scmp.ne.s32.totalorder %s68, %s71
    %p80 = scmp.eq.s32.totalorder %s14, 1
    %p81 = por %p79, %p80
    %p82 = scmp.ne.s32.totalorder %s71, %s72
    %p83 = scmp.eq.s32.totalorder %s14, 0
    %p84 = por %p82, %p83
    %p85 = scmp.ne.s32.totalorder %s71, %s72
    %p86 = scmp.eq.s32.totalorder %s15, 1
    %p87 = por %p85, %p86
    %p89 = scmp.ne.s32.totalorder %s72, %s88
    %p90 = scmp.eq.s32.totalorder %s15, 0
    %p91 = por %p89, %p90
    %s92 = ssub.s32 %s17, %s31
    %p93 = scmp.eq.s32.totalorder %s92, 0
    %s95 = sadd.s32 %s94, 1
    %s96 = scalar_select %p93, %s94, %s95
    %p99 = pneg %p93
    %p100 = scmp.eq.s32.totalorder %s9, 1
    %p101 = por %p99, %p100
    %p102 = scmp.ne.s32.totalorder %s94, %s97
    %p103 = scmp.eq.s32.totalorder %s9, 0
    %p104 = por %p102, %p103
    %p105 = scmp.ne.s32.totalorder %s94, %s97
    %p106 = scmp.eq.s32.totalorder %s14, 1
    %p107 = por %p105, %p106
    %p108 = scmp.ne.s32.totalorder %s97, %s98
    %p109 = scmp.eq.s32.totalorder %s14, 0
    %p110 = por %p108, %p109
    %p111 = scmp.ne.s32.totalorder %s97, %s98
    %p112 = scmp.eq.s32.totalorder %s15, 1
    %p113 = por %p111, %p112
    %p115 = scmp.ne.s32.totalorder %s98, %s114
    %p116 = scmp.eq.s32.totalorder %s15, 0
    %p117 = por %p115, %p116
    %s118 = ssub.s32 %s16, %s35
    %s119 = ssub.s32 %s17, %s31
    %s120 = sor.u32 %s118, %s119
    %p121 = scmp.eq.s32.totalorder %s120, 0
    %s123 = sadd.s32 %s122, 1
    %s124 = scalar_select %p121, %s122, %s123
    %p127 = pneg %p121
    %p128 = scmp.eq.s32.totalorder %s9, 1
    %p129 = por %p127, %p128
    %p130 = scmp.ne.s32.totalorder %s122, %s125
    %p131 = scmp.eq.s32.totalorder %s9, 0
    %p132 = por %p130, %p131
    %p133 = scmp.ne.s32.totalorder %s122, %s125
    %p134 = scmp.eq.s32.totalorder %s14, 1
    %p135 = por %p133, %p134
    %p136 = scmp.ne.s32.totalorder %s125, %s126
    %p137 = scmp.eq.s32.totalorder %s14, 0
    %p138 = por %p136, %p137
    %p139 = scmp.ne.s32.totalorder %s125, %s126
    %p140 = scmp.eq.s32.totalorder %s15, 1
    %p141 = por %p139, %p140
    %p143 = scmp.ne.s32.totalorder %s126, %s142
    %p144 = scmp.eq.s32.totalorder %s15, 0
    %p145 = por %p143, %p144
    %p146 = scmp.le.s32.totalorder 1, %s9
    %p147 = scmp.lt.s32.totalorder %s9, 3
    %p148 = pnand %p146, %p147
    %p149 = pneg %p148
    // Predicated region
    $region9: #{chunk_fan_in.1} parent=5 // pred_check
      _
    $region10: #{chunk_fan_in.1} parent=5 // pred_check_branch
      %151 = sbr.rel (%p148) target = $region12
    $region11: #{chunk_fan_in.1} parent=5 // pred_region
      %s152 = ssub.s32 %s9, 1
      // Predicated region
      $region13: #{chunk_fan_in.1} parent=11 // pred_check
        %p153 = pneg %p84
      $region14: #{chunk_fan_in.1} parent=11 // pred_check_branch
        %155 = sbr.rel (%p153) target = $region16
      $region15: #{chunk_fan_in.1} parent=11 // pred_region
        %s156 = smul.u32 16, %s21
        %p157 = scmp.lt.s32.totalorder %s156, 15
        %s158 = scalar_select %p157, %s156, 15
        %p159 = scmp.lt.s32.totalorder %s20, 0
        %s160 = scalar_select %p159, %s20, 0
        %s161 = sadd.s32 %s160, %s158
        %s162 = smul.addr %s161, 8
        %s163 = scalar_lea.vmem %s1, %s162
        %s164 = smul.u32 16, %s21
      $region16: #{chunk_fan_in.1} parent=11 // pred_fallthru
        _
      // Predicated region
      $region17: #{chunk_fan_in.1} parent=11 // pred_check
        %p165 = pneg %p110
      $region18: #{chunk_fan_in.1} parent=11 // pred_check_branch
        %167 = sbr.rel (%p165) target = $region20
      $region19: #{chunk_fan_in.1} parent=11 // pred_region
        %p168 = scmp.lt.s32.totalorder %s20, 0
        %s169 = scalar_select %p168, %s20, 0
        %s170 = scalar_lea.vmem %s2, %s169
      $region20: #{chunk_fan_in.1} parent=11 // pred_fallthru
        _
    $region12: #{chunk_fan_in.1} parent=5 // pred_fallthru
      _
    %p171 = scmp.lt.s32.totalorder %s9, 2
    // Predicated region
    $region21: #{chunk_fan_in.1} parent=5 // pred_check
      %p172 = pneg %p171
    $region22: #{chunk_fan_in.1} parent=5 // pred_check_branch
      %174 = sbr.rel (%p172) target = $region24
    $region23: #{chunk_fan_in.1} parent=5 // pred_region
      // Predicated region
      $region25: #{chunk_fan_in.1} parent=23 // pred_check
        %p175 = pneg %p50
      $region26: #{chunk_fan_in.1} parent=23 // pred_check_branch
        %177 = sbr.rel (%p175) target = $region28
      $region27: #{chunk_fan_in.1} parent=23 // pred_region
        %p178 = scmp.lt.s32.totalorder %s16, 1
        %s179 = scalar_select %p178, %s16, 1
        %p180 = scmp.lt.s32.totalorder %s18, 0
        %s181 = scalar_select %p180, %s18, 0
        %s182 = sadd.s32 %s181, %s179
        %s183 = smul.addr %s182, 8
        %s184 = scalar_lea.vmem %s0, %s183
      $region28: #{chunk_fan_in.1} parent=23 // pred_fallthru
        _
    $region24: #{chunk_fan_in.1} parent=5 // pred_fallthru
      _
    %p185 = scmp.le.s32.totalorder 1, %s9
    %p186 = scmp.lt.s32.totalorder %s9, 3
    %p187 = pnand %p185, %p186
    %p188 = pneg %p187
    // Predicated region
    $region29: #{chunk_fan_in.1} parent=5 // pred_check
      _
    $region30: #{chunk_fan_in.1} parent=5 // pred_check_branch
      %190 = sbr.rel (%p187) target = $region32
    $region31: #{chunk_fan_in.1} parent=5 // pred_region
      %s191 = ssub.s32 %s9, 1
      %p192 = scmp.lt.s32.totalorder %s19, 1
      %s193 = scalar_select %p192, %s19, 1
      %p194 = scmp.lt.s32.totalorder %s21, 0
      %s195 = scalar_select %p194, %s21, 0
      %s196 = sadd.s32 %s195, %s193
      %s197 = smul.addr %s196, 8
      %s198 = scalar_lea.vmem %s0, %s197
      %p199 = pneg %p56
      %p200 = pneg %p53
      %s201 = smul.u32 16, %s21
      %p202 = scmp.lt.s32.totalorder %s201, 15
      %s203 = scalar_select %p202, %s201, 15
      %p204 = scmp.lt.s32.totalorder %s20, 0
      %s205 = scalar_select %p204, %s20, 0
      %s206 = sadd.s32 %s205, %s203
      %s207 = smul.addr %s206, 8
      %s208 = scalar_lea.vmem %s1, %s207
      %p209 = pneg %p84
      %p210 = pneg %p81
      %p211 = scmp.lt.s32.totalorder %s20, 0
      %s212 = scalar_select %p211, %s20, 0
      %s213 = scalar_lea.vmem %s2, %s212
      %p214 = pneg %p110
      %p215 = pneg %p107
      %p216 = pneg %p138
      %p217 = pneg %p135
      %p218 = scmp.lt.s32.totalorder %s19, 1
      %s219 = scalar_select %p218, %s19, 1
      %p220 = scmp.lt.s32.totalorder %s20, 0
      %s221 = scalar_select %p220, %s20, 0
      %s222 = sadd.s32 %s221, %s219
      %s223 = smul.addr %s222, 8
      %s224 = scalar_lea.vmem %s3, %s223
      %p225 = scmp.lt.s32.totalorder %s19, 1
      %s226 = scalar_select %p225, %s19, 1
      %p227 = scmp.lt.s32.totalorder %s21, 0
      %s228 = scalar_select %p227, %s21, 0
      %s229 = sadd.s32 %s228, %s226
      %s230 = smul.addr %s229, 8
      %s231 = scalar_lea.vmem %s0, %s230
      %s232 = smul.u32 16, %s21
      %p233 = scmp.lt.s32.totalorder %s232, 15
      %s234 = scalar_select %p233, %s232, 15
      %p235 = scmp.lt.s32.totalorder %s20, 0
      %s236 = scalar_select %p235, %s20, 0
      %s237 = sadd.s32 %s236, %s234
      %s238 = smul.addr %s237, 8
      %s239 = scalar_lea.vmem %s1, %s238
      %s240 = smul.u32 16, %s21
      %p241 = scmp.lt.s32.totalorder %s20, 0
      %s242 = scalar_select %p241, %s20, 0
      %s243 = scalar_lea.vmem %s2, %s242
      %p244 = scmp.lt.s32.totalorder %s19, 1
      %s245 = scalar_select %p244, %s19, 1
      %p246 = scmp.lt.s32.totalorder %s20, 0
      %s247 = scalar_select %p246, %s20, 0
      %s248 = sadd.s32 %s247, %s245
      %s249 = smul.addr %s248, 8
      %s250 = scalar_lea.vmem %s3, %s249
      %v251 = vld [vmem:[%s231] sm:$0xff]
      %v252 = vld [vmem:[%s239] sm:$0xff]
      %v253 = vld [vmem:[%s239 + $0x8] sm:$0xff]
      %v254 = vld [vmem:[%s239 + $0x10] sm:$0xff]
      %v255 = vld [vmem:[%s239 + $0x18] sm:$0xff]
      %v256 = vld [vmem:[%s239 + $0x20] sm:$0xff]
      %v257 = vld [vmem:[%s239 + $0x28] sm:$0xff]
      %v258 = vld [vmem:[%s239 + $0x30] sm:$0xff]
      %v259 = vld [vmem:[%s239 + $0x38] sm:$0xff]
      %v260 = vld [vmem:[%s239 + $0x40] sm:$0xff]
      %v261 = vld [vmem:[%s239 + $0x48] sm:$0xff]
      %v262 = vld [vmem:[%s239 + $0x50] sm:$0xff]
      %v263 = vld [vmem:[%s239 + $0x58] sm:$0xff]
      %v264 = vld [vmem:[%s239 + $0x60] sm:$0xff]
      %v265 = vld [vmem:[%s239 + $0x68] sm:$0xff]
      %v266 = vld [vmem:[%s239 + $0x70] sm:$0xff]
      %v267 = vld [vmem:[%s239 + $0x78] sm:$0xff]
      %v268 = vld [vmem:[%s243] sm:$0x1]
      %v270 = vperm.slane %v268, 0
      %272 = vmatpush.msra.mxu0 %v267
      %273 = vmatpush.msra.mxu0 %v266
      %274 = vmatpush.msra.mxu0 %v265
      %275 = vmatpush.msra.mxu0 %v264
      %276 = vmatpush.msra.mxu0 %v263
      %277 = vmatpush.msra.mxu0 %v262
      %278 = vmatpush.msra.mxu0 %v261
      %279 = vmatpush.msra.mxu0 %v260
      %280 = vmatpush.msra.mxu0 %v259
      %281 = vmatpush.msra.mxu0 %v258
      %282 = vmatpush.msra.mxu0 %v257
      %283 = vmatpush.msra.mxu0 %v256
      %284 = vmatpush.msra.mxu0 %v255
      %285 = vmatpush.msra.mxu0 %v254
      %286 = vmatpush.msra.mxu0 %v253
      %287 = vmatpush.msra.mxu0 %v252
      %288 = vmatmul.f32.gmra.mxu0 %v251
      %v289 = vpop.f32.mrf.mxu0
      %v290 = vadd.f32 %v270, %v289
      %291 = vdwg.mxu0
      %292 = vst [vmem:[%s250] sm:$0xff] %v290
      %p293 = scmp.lt.s32.totalorder %s19, 1
      %s294 = scalar_select %p293, %s19, 1
      %p295 = scmp.lt.s32.totalorder %s20, 0
      %s296 = scalar_select %p295, %s20, 0
      %s297 = sadd.s32 %s296, %s294
      %s298 = smul.addr %s297, 8
      %s299 = scalar_lea.vmem %s3, %s298
      // Predicated region
      $region33: #{chunk_fan_in.1} parent=31 // pred_check
        %p300 = pneg %p135
      $region34: #{chunk_fan_in.1} parent=31 // pred_check_branch
        %302 = sbr.rel (%p300) target = $region36
      $region35: #{chunk_fan_in.1} parent=31 // pred_region
        _
      $region36: #{chunk_fan_in.1} parent=31 // pred_fallthru
        _
    $region32: #{chunk_fan_in.1} parent=5 // pred_fallthru
      _
    %p303 = scmp.le.s32.totalorder 2, %s9
    // Predicated region
    $region37: #{chunk_fan_in.1} parent=5 // pred_check
      %p304 = pneg %p303
    $region38: #{chunk_fan_in.1} parent=5 // pred_check_branch
      %306 = sbr.rel (%p304) target = $region40
    $region39: #{chunk_fan_in.1} parent=5 // pred_region
      %s307 = ssub.s32 %s9, 2
      // Predicated region
      $region41: #{chunk_fan_in.1} parent=39 // pred_check
        %p308 = pneg %p141
      $region42: #{chunk_fan_in.1} parent=39 // pred_check_branch
        %310 = sbr.rel (%p308) target = $region44
      $region43: #{chunk_fan_in.1} parent=39 // pred_region
        %p311 = scmp.lt.s32.totalorder %s22, 1
        %s312 = scalar_select %p311, %s22, 1
        %p313 = scmp.lt.s32.totalorder %s23, 0
        %s314 = scalar_select %p313, %s23, 0
        %s315 = sadd.s32 %s314, %s312
        %s316 = smul.addr %s315, 8
        %s317 = scalar_lea.vmem %s3, %s316
      $region44: #{chunk_fan_in.1} parent=39 // pred_fallthru
        _
    $region40: #{chunk_fan_in.1} parent=5 // pred_fallthru
      _
  $region6: #{chunk_fan_in.1} parent=0 // loop_footer
    %s13 = sadd.s32 1, %s9
  $region7: #{chunk_fan_in.1} parent=0 // loop_footer_branch
    %8 = sbr.rel target = $region3
  $region8: #{chunk_fan_in.1} parent=0 // loop_exit
    _

</llo_original>
